<compile_context>
chip_gen: v7x
topology: tpu7x:2x2x1
jax: 0.10.0
libtpu: 0.0.40
codegen_flags: <defaults>
</compile_context>

<pallas_src>
import jax
import jax.numpy as jnp
from jax import lax
from jax.experimental import pallas as pl
from jax.experimental.pallas import tpu as pltpu


# ----------------------------- Pallas kernels ------------------------------

def conv_stats_kernel(w_ref, p_ref, y_ref, sum_ref, sq_ref):
    """Grid = (M_tiles,). One MXU dot per tile (taps folded into the K axis),
    plus per-tile partial BN statistics (per-channel sum / sum-of-squares)."""
    # (Cout, T*Cin) @ (T*Cin, tm) -> (Cout, tm), f32 accumulation on the MXU.
    y = jnp.dot(w_ref[...], p_ref[...], preferred_element_type=jnp.float32)
    y_ref[...] = y.astype(y_ref.dtype)
    # Lane reductions -> (Cout, 1); stored as this tile's partial stats.
    sum_ref[...] = jnp.sum(y, axis=1, keepdims=True)[None]
    sq_ref[...] = jnp.sum(y * y, axis=1, keepdims=True)[None]


def bn_relu_kernel(y_ref, scale_ref, shift_ref, o_ref):
    """Elementwise BN apply (precomputed per-channel scale/shift) + ReLU."""
    o_ref[...] = jnp.maximum(
        y_ref[...] * scale_ref[...] + shift_ref[...], 0.0).astype(o_ref.dtype)


# ------------------------------- helpers ------------------------------------

def _pick_tile(M, row_bytes, *, budget_bytes=20 * 1024 * 1024, lane=128):
    """Largest tile that divides M, is a multiple of `lane` (lane-dense stores)
    and whose double-buffered footprint fits a conservative VMEM budget
    (sized against v7x's 64 MiB physical / 32 MiB scoped VMEM)."""
    if M % lane != 0:
        # TODO(synk): ragged M needs a masked tail tile; pad M outside instead.
        return M
    best = lane
    for t in range(lane, M + 1, lane):
        if 2 * t * row_bytes > budget_bytes:
            break
        if M % t == 0:
            best = t
    return best


# ------------------------------- wrapper ------------------------------------

def conv_bn_relu_3d(x, weight, gamma, beta, *, eps=1e-5, stride=1, padding=1,
                    compute_dtype=jnp.float32):
    """x: (N, Cin, D, H, W); weight: (Cout, Cin, K, K, K); gamma/beta: (Cout,)"""
    N, Cin, D, H, W = x.shape
    Cout, _, K, _, _ = weight.shape
    s, p = stride, padding
    Do = (D + 2 * p - K) // s + 1
    Ho = (H + 2 * p - K) // s + 1
    Wo = (W + 2 * p - K) // s + 1
    M = N * Do * Ho * Wo
    T = K * K * K
    TC = T * Cin

    # ---- XLA glue: channels-last pad + im2col (tap-major, Cin-minor) ----
    # TODO(synk): for production sizes skip this materialized im2col (~27x input
    # HBM traffic): keep the padded input in HBM (memory_space=pl.ANY), DMA
    # halo'd spatial blocks into VMEM and form the taps with shifted reads.
    x_cl = jnp.transpose(x, (0, 2, 3, 4, 1))                       # (N,D,H,W,Cin)
    xp = jnp.pad(x_cl, ((0, 0), (p, p), (p, p), (p, p), (0, 0)))
    taps = []
    for kd in range(K):
        for kh in range(K):
            for kw in range(K):
                sl = xp[:,
                        kd:kd + (Do - 1) * s + 1:s,
                        kh:kh + (Ho - 1) * s + 1:s,
                        kw:kw + (Wo - 1) * s + 1:s, :]
                taps.append(sl.reshape(M, Cin))
    Pt = jnp.concatenate(taps, axis=1).T.astype(compute_dtype)     # (T*Cin, M)
    Wt = jnp.transpose(weight, (0, 2, 3, 4, 1)).reshape(Cout, TC)  # (Cout, T*Cin)
    Wt = Wt.astype(compute_dtype)

    # ---- tiling ----
    row_bytes = TC * jnp.dtype(compute_dtype).itemsize + Cout * 4
    tm = _pick_tile(M, row_bytes)
    assert M % tm == 0
    n_tiles = M // tm

    cparams = pltpu.CompilerParams(
        dimension_semantics=("parallel",),
        vmem_limit_bytes=32 * 1024 * 1024)

    # ---- kernel A: conv (single folded-tap matmul per tile) + partial stats ----
    y, sum_p, sq_p = pl.pallas_call(
        conv_stats_kernel,
        out_shape=(jax.ShapeDtypeStruct((Cout, M), jnp.float32),
                   jax.ShapeDtypeStruct((n_tiles, Cout, 1), jnp.float32),
                   jax.ShapeDtypeStruct((n_tiles, Cout, 1), jnp.float32)),
        grid_spec=pltpu.PrefetchScalarGridSpec(
            num_scalar_prefetch=0,
            grid=(n_tiles,),
            in_specs=[pl.BlockSpec((Cout, TC), lambda i: (0, 0)),   # weights resident
                      pl.BlockSpec((TC, tm), lambda i: (0, i))],
            out_specs=[pl.BlockSpec((Cout, tm), lambda i: (0, i)),
                       pl.BlockSpec((1, Cout, 1), lambda i: (i, 0, 0)),
                       pl.BlockSpec((1, Cout, 1), lambda i: (i, 0, 0))]),
        compiler_params=cparams,
    )(Wt, Pt)

    # ---- tiny final BN-stat reduction + scale/shift in plain JAX ----
    sum_c = jnp.sum(sum_p, axis=0)[:, 0]                # (Cout,)
    sq_c = jnp.sum(sq_p, axis=0)[:, 0]                  # (Cout,)
    mean = sum_c / M
    var = sq_c / M - mean * mean                        # biased (BN forward)
    scale = (gamma.astype(jnp.float32) * lax.rsqrt(var + eps)).reshape(Cout, 1)
    shift = beta.astype(jnp.float32).reshape(Cout, 1) - mean.reshape(Cout, 1) * scale

    # ---- kernel B: BN apply + ReLU (output aliased onto y) ----
    alias = {0: 0} if y.dtype == x.dtype else {}
    out_cm = pl.pallas_call(
        bn_relu_kernel,
        out_shape=jax.ShapeDtypeStruct((Cout, M), x.dtype),
        grid_spec=pltpu.PrefetchScalarGridSpec(
            num_scalar_prefetch=0,
            grid=(n_tiles,),
            in_specs=[pl.BlockSpec((Cout, tm), lambda i: (0, i)),
                      pl.BlockSpec((Cout, 1), lambda i: (0, 0)),
                      pl.BlockSpec((Cout, 1), lambda i: (0, 0))],
            out_specs=pl.BlockSpec((Cout, tm), lambda i: (0, i))),
        input_output_aliases=alias,
        compiler_params=cparams,
    )(y, scale, shift)

    # back to PyTorch NCDHW layout (cheap leading-axis swap, contiguous DHW)
    return out_cm.reshape(Cout, N, Do, Ho, Wo).transpose(1, 0, 2, 3, 4)


# ------------------------------- reference ----------------------------------

def reference(x, weight, gamma, beta, eps=1e-5):
    y = lax.conv_general_dilated(
        x, weight, window_strides=(1, 1, 1), padding=[(1, 1)] * 3,
        dimension_numbers=('NCDHW', 'OIDHW', 'NCDHW'),
        precision=lax.Precision.HIGHEST)
    mean = y.mean(axis=(0, 2, 3, 4), keepdims=True)
    var = y.var(axis=(0, 2, 3, 4), keepdims=True)       # biased, as BN forward uses
    yn = (y - mean) / jnp.sqrt(var + eps)
    yn = yn * gamma.reshape(1, -1, 1, 1, 1) + beta.reshape(1, -1, 1, 1, 1)
    return jnp.maximum(yn, 0.0)


# --------------------------------- main --------------------------------------

if __name__ == "__main__":
    key = jax.random.PRNGKey(0)
    k_x, k_w, k_g, k_b = jax.random.split(key, 4)

    N, Cin, Cout, D, H, W, K = 2, 4, 8, 8, 8, 8, 3

    x = jax.random.normal(k_x, (N, Cin, D, H, W), dtype=jnp.float32)
    fan_in = Cin * K * K * K
    weight = jax.random.normal(k_w, (Cout, Cin, K, K, K), dtype=jnp.float32) / jnp.sqrt(fan_in)
    gamma = 1.0 + 0.1 * jax.random.normal(k_g, (Cout,), dtype=jnp.float32)
    beta = 0.05 * jax.random.normal(k_b, (Cout,), dtype=jnp.float32)

    fwd = jax.jit(conv_bn_relu_3d)
    out = jax.block_until_ready(fwd(x, weight, gamma, beta))

    ref = reference(x, weight, gamma, beta)
    assert out.shape == (N, Cout, D, H, W), out.shape
    err = float(jnp.max(jnp.abs(out - ref)))
    assert jnp.allclose(out, ref, atol=1e-3, rtol=1e-3), err

    print("KERNEL_OK")
</pallas_src>

<mosaic_0001>
module attributes {stable_mosaic.version = 11 : i64} {
  func.func @conv_stats_kernel(%arg0: i32, %arg1: memref<8x108xf32, #tpu.memory_space<vmem>>, %arg2: memref<108x1024xf32, #tpu.memory_space<vmem>>, %arg3: memref<8x1024xf32, #tpu.memory_space<vmem>>, %arg4: memref<1x8x1xf32, #tpu.memory_space<vmem>>, %arg5: memref<1x8x1xf32, #tpu.memory_space<vmem>>) attributes {dimension_semantics = [#tpu.dimension_semantics<parallel>], iteration_bounds = array<i64: 1>, scalar_prefetch = 0 : i64, scratch_operands = 0 : i64, tpu.core_type = #tpu.core_type<tc>, window_params = [{pipeline_mode = #tpu.pipeline_mode<synchronous>, transform_indices = @transform_0, window_bounds = array<i64: 8, 108>}, {transform_indices = @transform_1, window_bounds = array<i64: 108, 1024>}, {transform_indices = @transform_2, window_bounds = array<i64: 8, 1024>}, {transform_indices = @transform_3, window_bounds = array<i64: 1, 8, 1>}, {transform_indices = @transform_4, window_bounds = array<i64: 1, 8, 1>}]} {
    %c0 = arith.constant 0 : index
    %c0_0 = arith.constant 0 : index
    %0 = vector.load %arg1[%c0, %c0_0] : memref<8x108xf32, #tpu.memory_space<vmem>>, vector<8x108xf32>
    %c0_1 = arith.constant 0 : index
    %c0_2 = arith.constant 0 : index
    %1 = vector.load %arg2[%c0_1, %c0_2] : memref<108x1024xf32, #tpu.memory_space<vmem>>, vector<108x1024xf32>
    %cst = arith.constant dense<0.000000e+00> : vector<8x1024xf32>
    %2 = tpu.matmul %0, %1, %cst {dimension_numbers = #tpu.dot_dimension_numbers<[1], [0], [0], [1], [0, 0, 1, 1], [], []>} : vector<8x108xf32>, vector<108x1024xf32>, vector<8x1024xf32> -> vector<8x1024xf32>
    %c0_3 = arith.constant 0 : index
    %c0_4 = arith.constant 0 : index
    %3 = vector.load %arg3[%c0_3, %c0_4] : memref<8x1024xf32, #tpu.memory_space<vmem>>, vector<8x1024xf32>
    tpu.vector_store %arg3[%c0_3, %c0_4], %2 {strides = array<i32>} : memref<8x1024xf32, #tpu.memory_space<vmem>>, vector<8x1024xf32>,
    %cst_5 = arith.constant dense<0.000000e+00> : vector<8xf32>
    %4 = vector.multi_reduction <add>, %2, %cst_5 [1] : vector<8x1024xf32> to vector<8xf32>
    %5 = vector.shape_cast %4 : vector<8xf32> to vector<8x1xf32>
    %6 = vector.shape_cast %5 : vector<8x1xf32> to vector<1x8x1xf32>
    %c0_6 = arith.constant 0 : index
    %c0_7 = arith.constant 0 : index
    %c0_8 = arith.constant 0 : index
    %7 = vector.load %arg4[%c0_6, %c0_7, %c0_8] : memref<1x8x1xf32, #tpu.memory_space<vmem>>, vector<1x8x1xf32>
    tpu.vector_store %arg4[%c0_6, %c0_7, %c0_8], %6 {strides = array<i32>} : memref<1x8x1xf32, #tpu.memory_space<vmem>>, vector<1x8x1xf32>,
    %8 = arith.mulf %2, %2 : vector<8x1024xf32>
    %cst_9 = arith.constant dense<0.000000e+00> : vector<8xf32>
    %9 = vector.multi_reduction <add>, %8, %cst_9 [1] : vector<8x1024xf32> to vector<8xf32>
    %10 = vector.shape_cast %9 : vector<8xf32> to vector<8x1xf32>
    %11 = vector.shape_cast %10 : vector<8x1xf32> to vector<1x8x1xf32>
    %c0_10 = arith.constant 0 : index
    %c0_11 = arith.constant 0 : index
    %c0_12 = arith.constant 0 : index
    %12 = vector.load %arg5[%c0_10, %c0_11, %c0_12] : memref<1x8x1xf32, #tpu.memory_space<vmem>>, vector<1x8x1xf32>
    tpu.vector_store %arg5[%c0_10, %c0_11, %c0_12], %11 {strides = array<i32>} : memref<1x8x1xf32, #tpu.memory_space<vmem>>, vector<1x8x1xf32>,
    return
  }
  func.func @transform_0(%arg0: i32) -> (i32, i32) {
    %c0_i32 = arith.constant 0 : i32
    %c0_i32_0 = arith.constant 0 : i32
    %c0_i32_1 = arith.constant 0 : i32
    return %c0_i32, %c0_i32_0 : i32, i32
  }
  func.func @transform_1(%arg0: i32) -> (i32, i32) {
    %c0_i32 = arith.constant 0 : i32
    %c0_i32_0 = arith.constant 0 : i32
    return %c0_i32, %arg0 : i32, i32
  }
  func.func @transform_2(%arg0: i32) -> (i32, i32) {
    %c0_i32 = arith.constant 0 : i32
    %c0_i32_0 = arith.constant 0 : i32
    return %c0_i32, %arg0 : i32, i32
  }
  func.func @transform_3(%arg0: i32) -> (i32, i32, i32) {
    %c0_i32 = arith.constant 0 : i32
    %c0_i32_0 = arith.constant 0 : i32
    %c0_i32_1 = arith.constant 0 : i32
    return %arg0, %c0_i32, %c0_i32_0 : i32, i32, i32
  }
  func.func @transform_4(%arg0: i32) -> (i32, i32, i32) {
    %c0_i32 = arith.constant 0 : i32
    %c0_i32_0 = arith.constant 0 : i32
    %c0_i32_1 = arith.constant 0 : i32
    return %arg0, %c0_i32, %c0_i32_0 : i32, i32, i32
  }
}

module attributes {stable_mosaic.version = 11 : i64} {
  func.func @bn_relu_kernel(%arg0: i32, %arg1: memref<8x1024xf32, #tpu.memory_space<vmem>>, %arg2: memref<8x1xf32, #tpu.memory_space<vmem>>, %arg3: memref<8x1xf32, #tpu.memory_space<vmem>>, %arg4: memref<8x1024xf32, #tpu.memory_space<vmem>>) attributes {dimension_semantics = [#tpu.dimension_semantics<parallel>], iteration_bounds = array<i64: 1>, scalar_prefetch = 0 : i64, scratch_operands = 0 : i64, tpu.core_type = #tpu.core_type<tc>, window_params = [{transform_indices = @transform_0, window_bounds = array<i64: 8, 1024>}, {pipeline_mode = #tpu.pipeline_mode<synchronous>, transform_indices = @transform_1, window_bounds = array<i64: 8, 1>}, {pipeline_mode = #tpu.pipeline_mode<synchronous>, transform_indices = @transform_2, window_bounds = array<i64: 8, 1>}, {transform_indices = @transform_3, window_bounds = array<i64: 8, 1024>}]} {
    %c0 = arith.constant 0 : index
    %c0_0 = arith.constant 0 : index
    %0 = vector.load %arg1[%c0, %c0_0] : memref<8x1024xf32, #tpu.memory_space<vmem>>, vector<8x1024xf32>
    %c0_1 = arith.constant 0 : index
    %c0_2 = arith.constant 0 : index
    %1 = vector.load %arg2[%c0_1, %c0_2] : memref<8x1xf32, #tpu.memory_space<vmem>>, vector<8x1xf32>
    %2 = vector.broadcast %1 : vector<8x1xf32> to vector<8x1024xf32>
    %3 = arith.mulf %0, %2 : vector<8x1024xf32>
    %c0_3 = arith.constant 0 : index
    %c0_4 = arith.constant 0 : index
    %4 = vector.load %arg3[%c0_3, %c0_4] : memref<8x1xf32, #tpu.memory_space<vmem>>, vector<8x1xf32>
    %5 = vector.broadcast %4 : vector<8x1xf32> to vector<8x1024xf32>
    %6 = arith.addf %3, %5 : vector<8x1024xf32>
    %cst = arith.constant 0.000000e+00 : f32
    %7 = vector.broadcast %cst : f32 to vector<8x1024xf32>
    %8 = arith.maximumf %6, %7 : vector<8x1024xf32>
    %c0_5 = arith.constant 0 : index
    %c0_6 = arith.constant 0 : index
    %9 = vector.load %arg4[%c0_5, %c0_6] : memref<8x1024xf32, #tpu.memory_space<vmem>>, vector<8x1024xf32>
    tpu.vector_store %arg4[%c0_5, %c0_6], %8 {strides = array<i32>} : memref<8x1024xf32, #tpu.memory_space<vmem>>, vector<8x1024xf32>,
    return
  }
  func.func @transform_0(%arg0: i32) -> (i32, i32) {
    %c0_i32 = arith.constant 0 : i32
    %c0_i32_0 = arith.constant 0 : i32
    return %c0_i32, %arg0 : i32, i32
  }
  func.func @transform_1(%arg0: i32) -> (i32, i32) {
    %c0_i32 = arith.constant 0 : i32
    %c0_i32_0 = arith.constant 0 : i32
    %c0_i32_1 = arith.constant 0 : i32
    return %c0_i32, %c0_i32_0 : i32, i32
  }
  func.func @transform_2(%arg0: i32) -> (i32, i32) {
    %c0_i32 = arith.constant 0 : i32
    %c0_i32_0 = arith.constant 0 : i32
    %c0_i32_1 = arith.constant 0 : i32
    return %c0_i32, %c0_i32_0 : i32, i32
  }
  func.func @transform_3(%arg0: i32) -> (i32, i32) {
    %c0_i32 = arith.constant 0 : i32
    %c0_i32_0 = arith.constant 0 : i32
    return %c0_i32, %arg0 : i32, i32
  }
}

</mosaic_0001>

<llo_original>
// kernel: conv_bn_relu_3d.2
$region0: #{conv_bn_relu_3d.2}
  #allocation0 [shape = 'u32[]', space=smem, size = 0x4, offset = 0x4, fixed_abs, tag = 'smem constant byte address 0x4 - core index']
  #allocation1 [shape = 'u32[144,128]{1,0:T(1,128)}', space=vmem, size = 0x12000, scoped, tag = 'internal scratch']
  %s0 = inlined_call_operand.vmem [shape: f32[8,108], index: 0, kind: input, shape index: {}]
  %s1 = inlined_call_operand.vmem [shape: f32[108,1024], index: 1, kind: input, shape index: {}]
  %s2 = inlined_call_operand.vmem [shape: f32[8,1024], index: 2, kind: output, shape index: {0}]
  %s3 = inlined_call_operand.vmem [shape: f32[1,8,1], index: 3, kind: output, shape index: {1}]
  %s4 = inlined_call_operand.vmem [shape: f32[1,8,1], index: 4, kind: output, shape index: {2}]
  %5 = xla_tuple %s2, %s3, %s4
  %s6 = sld [smem:[#allocation0]]
  $region34: #{conv_bn_relu_3d.2} parent=0
    _
  %s8 = ssub.s32 1, %s6
  %s9 = scalar_select 0, %s8, %s6
  // Predicated region
  $region2: #{conv_bn_relu_3d.2} parent=0 // pred_check
    _
  $region3: #{conv_bn_relu_3d.2} parent=0 // pred_check_branch
    %11 = sbr.rel (0) target = $region5
  $region4: #{conv_bn_relu_3d.2} parent=0 // pred_region
    _
  $region5: #{conv_bn_relu_3d.2} parent=0 // pred_fallthru
    _
  // Predicated region
  $region6: #{conv_bn_relu_3d.2} parent=0 // pred_check
    _
  $region7: #{conv_bn_relu_3d.2} parent=0 // pred_check_branch
    %13 = sbr.rel (0) target = $region9
  $region8: #{conv_bn_relu_3d.2} parent=0 // pred_region
    _
  $region9: #{conv_bn_relu_3d.2} parent=0 // pred_fallthru
    _
  %v14 = vld [vmem:[%s0] sm:$0xff]
  %v15 = vld [vmem:[%s1] sm:$0xff]
  %v16 = vld [vmem:[%s1 + $0x8] sm:$0xff]
  %v17 = vld [vmem:[%s1 + $0x10] sm:$0xff]
  %v18 = vld [vmem:[%s1 + $0x18] sm:$0xff]
  %v19 = vld [vmem:[%s1 + $0x20] sm:$0xff]
  %v20 = vld [vmem:[%s1 + $0x28] sm:$0xff]
  %v21 = vld [vmem:[%s1 + $0x30] sm:$0xff]
  %v22 = vld [vmem:[%s1 + $0x38] sm:$0xff]
  %v23 = vld [vmem:[%s1 + $0x40] sm:$0xff]
  %v24 = vld [vmem:[%s1 + $0x48] sm:$0xff]
  %v25 = vld [vmem:[%s1 + $0x50] sm:$0xff]
  %v26 = vld [vmem:[%s1 + $0x58] sm:$0xff]
  %v27 = vld [vmem:[%s1 + $0x60] sm:$0xff]
  %v28 = vld [vmem:[%s1 + $0x68] sm:$0xff]
  %v29 = vld [vmem:[%s1 + $0x70] sm:$0xff]
  %v30 = vld [vmem:[%s1 + $0x78] sm:$0xff]
  %v31 = vld [vmem:[%s1 + $0x80] sm:$0xff]
  %v32 = vld [vmem:[%s1 + $0x88] sm:$0xff]
  %v33 = vld [vmem:[%s1 + $0x90] sm:$0xff]
  %v34 = vld [vmem:[%s1 + $0x98] sm:$0xff]
  %v35 = vld [vmem:[%s1 + $0xa0] sm:$0xff]
  %v36 = vld [vmem:[%s1 + $0xa8] sm:$0xff]
  %v37 = vld [vmem:[%s1 + $0xb0] sm:$0xff]
  %v38 = vld [vmem:[%s1 + $0xb8] sm:$0xff]
  %v39 = vld [vmem:[%s1 + $0xc0] sm:$0xff]
  %v40 = vld [vmem:[%s1 + $0xc8] sm:$0xff]
  %v41 = vld [vmem:[%s1 + $0xd0] sm:$0xff]
  %v42 = vld [vmem:[%s1 + $0xd8] sm:$0xff]
  %v43 = vld [vmem:[%s1 + $0xe0] sm:$0xff]
  %v44 = vld [vmem:[%s1 + $0xe8] sm:$0xff]
  %v45 = vld [vmem:[%s1 + $0xf0] sm:$0xff]
  %v46 = vld [vmem:[%s1 + $0xf8] sm:$0xff]
  %v47 = vld [vmem:[%s1 + $0x100] sm:$0xff]
  %v48 = vld [vmem:[%s1 + $0x108] sm:$0xff]
  %v49 = vld [vmem:[%s1 + $0x110] sm:$0xff]
  %v50 = vld [vmem:[%s1 + $0x118] sm:$0xff]
  %v51 = vld [vmem:[%s1 + $0x120] sm:$0xff]
  %v52 = vld [vmem:[%s1 + $0x128] sm:$0xff]
  %v53 = vld [vmem:[%s1 + $0x130] sm:$0xff]
  %v54 = vld [vmem:[%s1 + $0x138] sm:$0xff]
  %v55 = vld [vmem:[%s1 + $0x140] sm:$0xff]
  %v56 = vld [vmem:[%s1 + $0x148] sm:$0xff]
  %v57 = vld [vmem:[%s1 + $0x150] sm:$0xff]
  %v58 = vld [vmem:[%s1 + $0x158] sm:$0xff]
  %v59 = vld [vmem:[%s1 + $0x160] sm:$0xff]
  %v60 = vld [vmem:[%s1 + $0x168] sm:$0xff]
  %v61 = vld [vmem:[%s1 + $0x170] sm:$0xff]
  %v62 = vld [vmem:[%s1 + $0x178] sm:$0xff]
  %v63 = vld [vmem:[%s1 + $0x180] sm:$0xff]
  %v64 = vld [vmem:[%s1 + $0x188] sm:$0xff]
  %v65 = vld [vmem:[%s1 + $0x190] sm:$0xff]
  %v66 = vld [vmem:[%s1 + $0x198] sm:$0xff]
  %v67 = vld [vmem:[%s1 + $0x1a0] sm:$0xff]
  %v68 = vld [vmem:[%s1 + $0x1a8] sm:$0xff]
  %v69 = vld [vmem:[%s1 + $0x1b0] sm:$0xff]
  %v70 = vld [vmem:[%s1 + $0x1b8] sm:$0xff]
  %v71 = vld [vmem:[%s1 + $0x1c0] sm:$0xff]
  %v72 = vld [vmem:[%s1 + $0x1c8] sm:$0xff]
  %v73 = vld [vmem:[%s1 + $0x1d0] sm:$0xff]
  %v74 = vld [vmem:[%s1 + $0x1d8] sm:$0xff]
  %v75 = vld [vmem:[%s1 + $0x1e0] sm:$0xff]
  %v76 = vld [vmem:[%s1 + $0x1e8] sm:$0xff]
  %v77 = vld [vmem:[%s1 + $0x1f0] sm:$0xff]
  %v78 = vld [vmem:[%s1 + $0x1f8] sm:$0xff]
  %v79 = vld [vmem:[%s1 + $0x200] sm:$0xff]
  %v80 = vld [vmem:[%s1 + $0x208] sm:$0xff]
  %v81 = vld [vmem:[%s1 + $0x210] sm:$0xff]
  %v82 = vld [vmem:[%s1 + $0x218] sm:$0xff]
  %v83 = vld [vmem:[%s1 + $0x220] sm:$0xff]
  %v84 = vld [vmem:[%s1 + $0x228] sm:$0xff]
  %v85 = vld [vmem:[%s1 + $0x230] sm:$0xff]
  %v86 = vld [vmem:[%s1 + $0x238] sm:$0xff]
  %v87 = vld [vmem:[%s1 + $0x240] sm:$0xff]
  %v88 = vld [vmem:[%s1 + $0x248] sm:$0xff]
  %v89 = vld [vmem:[%s1 + $0x250] sm:$0xff]
  %v90 = vld [vmem:[%s1 + $0x258] sm:$0xff]
  %v91 = vld [vmem:[%s1 + $0x260] sm:$0xff]
  %v92 = vld [vmem:[%s1 + $0x268] sm:$0xff]
  %v93 = vld [vmem:[%s1 + $0x270] sm:$0xff]
  %v94 = vld [vmem:[%s1 + $0x278] sm:$0xff]
  %v95 = vld [vmem:[%s1 + $0x280] sm:$0xff]
  %v96 = vld [vmem:[%s1 + $0x288] sm:$0xff]
  %v97 = vld [vmem:[%s1 + $0x290] sm:$0xff]
  %v98 = vld [vmem:[%s1 + $0x298] sm:$0xff]
  %v99 = vld [vmem:[%s1 + $0x2a0] sm:$0xff]
  %v100 = vld [vmem:[%s1 + $0x2a8] sm:$0xff]
  %v101 = vld [vmem:[%s1 + $0x2b0] sm:$0xff]
  %v102 = vld [vmem:[%s1 + $0x2b8] sm:$0xff]
  %v103 = vld [vmem:[%s1 + $0x2c0] sm:$0xff]
  %v104 = vld [vmem:[%s1 + $0x2c8] sm:$0xff]
  %v105 = vld [vmem:[%s1 + $0x2d0] sm:$0xff]
  %v106 = vld [vmem:[%s1 + $0x2d8] sm:$0xff]
  %v107 = vld [vmem:[%s1 + $0x2e0] sm:$0xff]
  %v108 = vld [vmem:[%s1 + $0x2e8] sm:$0xff]
  %v109 = vld [vmem:[%s1 + $0x2f0] sm:$0xff]
  %v110 = vld [vmem:[%s1 + $0x2f8] sm:$0xff]
  %v111 = vld [vmem:[%s1 + $0x300] sm:$0xff]
  %v112 = vld [vmem:[%s1 + $0x308] sm:$0xff]
  %v113 = vld [vmem:[%s1 + $0x310] sm:$0xff]
  %v114 = vld [vmem:[%s1 + $0x318] sm:$0xff]
  %v115 = vld [vmem:[%s1 + $0x320] sm:$0xff]
  %v116 = vld [vmem:[%s1 + $0x328] sm:$0xff]
  %v117 = vld [vmem:[%s1 + $0x330] sm:$0xff]
  %v118 = vld [vmem:[%s1 + $0x338] sm:$0xff]
  %v119 = vld [vmem:[%s1 + $0x340] sm:$0xf]
  %v120 = vld [vmem:[%s1 + $0x348] sm:$0xf]
  %v121 = vld [vmem:[%s1 + $0x350] sm:$0xf]
  %v122 = vld [vmem:[%s1 + $0x358] sm:$0xf]
  %v123 = vld [vmem:[%s1 + $0x360] sm:$0xf]
  %v124 = vld [vmem:[%s1 + $0x368] sm:$0xf]
  %v125 = vld [vmem:[%s1 + $0x370] sm:$0xf]
  %v126 = vld [vmem:[%s1 + $0x378] sm:$0xf]
  %vm127 = vcmask 883712
  %v129 = vsel %vm127, %v14, 0
  %vm131 = vcmask 1043456
  %v133 = vsel %vm131, %v119, 0
  %v136 = vsel %vm131, %v120, 0
  %v139 = vsel %vm131, %v121, 0
  %v142 = vsel %vm131, %v122, 0
  %v145 = vsel %vm131, %v123, 0
  %v148 = vsel %vm131, %v124, 0
  %v151 = vsel %vm131, %v125, 0
  %v154 = vsel %vm131, %v126, 0
  %156 = vmatprep.subr.mxu0 %v16
  %157 = vmatpush1.msra.mxu0 %v15
  %158 = vmatprep.subr.mxu0 %v24
  %159 = vmatpush1.msra.mxu0 %v23
  %160 = vmatprep.subr.mxu0 %v32
  %161 = vmatpush1.msra.mxu0 %v31
  %162 = vmatprep.subr.mxu0 %v40
  %163 = vmatpush1.msra.mxu0 %v39
  %164 = vmatprep.subr.mxu0 %v48
  %165 = vmatpush1.msra.mxu0 %v47
  %166 = vmatprep.subr.mxu0 %v56
  %167 = vmatpush1.msra.mxu0 %v55
  %168 = vmatprep.subr.mxu0 %v64
  %169 = vmatpush1.msra.mxu0 %v63
  %170 = vmatprep.subr.mxu0 %v72
  %171 = vmatpush1.msra.mxu0 %v71
  %172 = vmatprep.subr.mxu0 %v80
  %173 = vmatpush1.msra.mxu0 %v79
  %174 = vmatprep.subr.mxu0 %v88
  %175 = vmatpush1.msra.mxu0 %v87
  %176 = vmatprep.subr.mxu0 %v96
  %177 = vmatpush1.msra.mxu0 %v95
  %178 = vmatprep.subr.mxu0 %v104
  %179 = vmatpush1.msra.mxu0 %v103
  %180 = vmatprep.subr.mxu0 %v112
  %181 = vmatpush1.msra.mxu0 %v111
  %182 = vmatprep.subr.mxu0 %v136
  %183 = vmatpush1.msra.mxu0 %v133
  %184 = vmatprep.subr.mxu0 0.0
  %185 = vmatpush1.msra.mxu0 0.0
  %186 = vmatprep.subr.mxu0 0.0
  %187 = vmatpush1.msra.mxu0 0.0
  %188 = vmatprep.subr.mxu0 0.0
  %189 = vmatpush1.msra.mxu0 0.0
  %190 = vmatprep.subr.mxu0 0.0
  %191 = vmatpush1.msra.mxu0 0.0
  %192 = vmatprep.subr.mxu0 0.0
  %193 = vmatpush1.msra.mxu0 0.0
  %194 = vmatprep.subr.mxu0 0.0
  %195 = vmatpush1.msra.mxu0 0.0
  %196 = vmatprep.subr.mxu0 0.0
  %197 = vmatpush1.msra.mxu0 0.0
  %198 = vmatprep.subr.mxu0 0.0
  %199 = vmatpush1.msra.mxu0 0.0
  %200 = vmatprep.subr.mxu0 0.0
  %201 = vmatpush1.msra.mxu0 0.0
  %202 = vmatprep.subr.mxu0 0.0
  %203 = vmatpush1.msra.mxu0 0.0
  %204 = vmatprep.subr.mxu0 0.0
  %205 = vmatpush1.msra.mxu0 0.0
  %206 = vmatprep.subr.mxu0 0.0
  %207 = vmatpush1.msra.mxu0 0.0
  %208 = vmatprep.subr.mxu0 0.0
  %209 = vmatpush1.msra.mxu0 0.0
  %210 = vmatprep.subr.mxu0 0.0
  %211 = vmatpush1.msra.mxu0 0.0
  %212 = vmatprep.subr.mxu0 0.0
  %213 = vmatpush1.msra.mxu0 0.0
  %214 = vmatprep.subr.mxu0 0.0
  %215 = vmatpush1.msra.mxu0 0.0
  %216 = vmatprep.subr.mxu0 0.0
  %217 = vmatpush1.msra.mxu0 0.0
  %218 = vmatprep.subr.mxu0 0.0
  %219 = vmatpush1.msra.mxu0 0.0
  %220 = vmatprep.mubr.f32.mxu0 0.0
  %221 = vmatmul.mubr.f32.gmra.mrb[0].mxu0 %v129
  %v222 = vpop.f32.mrb[0].mxu0
  %v223 = vadd.f32 0.0, %v222
  %v224 = vpop.f32.mrb[0].mxu0
  %v225 = vadd.f32 0.0, %v224
  %226 = vdwg.mxu0
  %227 = vmatprep.subr.mxu0 %v18
  %228 = vmatpush1.msra.mxu0 %v17
  %229 = vmatprep.subr.mxu0 %v26
  %230 = vmatpush1.msra.mxu0 %v25
  %231 = vmatprep.subr.mxu0 %v34
  %232 = vmatpush1.msra.mxu0 %v33
  %233 = vmatprep.subr.mxu0 %v42
  %234 = vmatpush1.msra.mxu0 %v41
  %235 = vmatprep.subr.mxu0 %v50
  %236 = vmatpush1.msra.mxu0 %v49
  %237 = vmatprep.subr.mxu0 %v58
  %238 = vmatpush1.msra.mxu0 %v57
  %239 = vmatprep.subr.mxu0 %v66
  %240 = vmatpush1.msra.mxu0 %v65
  %241 = vmatprep.subr.mxu0 %v74
  %242 = vmatpush1.msra.mxu0 %v73
  %243 = vmatprep.subr.mxu0 %v82
  %244 = vmatpush1.msra.mxu0 %v81
  %245 = vmatprep.subr.mxu0 %v90
  %246 = vmatpush1.msra.mxu0 %v89
  %247 = vmatprep.subr.mxu0 %v98
  %248 = vmatpush1.msra.mxu0 %v97
  %249 = vmatprep.subr.mxu0 %v106
  %250 = vmatpush1.msra.mxu0 %v105
  %251 = vmatprep.subr.mxu0 %v114
  %252 = vmatpush1.msra.mxu0 %v113
  %253 = vmatprep.subr.mxu0 %v142
  %254 = vmatpush1.msra.mxu0 %v139
  %255 = vmatprep.subr.mxu0 0.0
  %256 = vmatpush1.msra.mxu0 0.0
  %257 = vmatprep.subr.mxu0 0.0
  %258 = vmatpush1.msra.mxu0 0.0
  %259 = vmatprep.subr.mxu0 0.0
  %260 = vmatpush1.msra.mxu0 0.0
  %261 = vmatprep.subr.mxu0 0.0
  %262 = vmatpush1.msra.mxu0 0.0
  %263 = vmatprep.subr.mxu0 0.0
  %264 = vmatpush1.msra.mxu0 0.0
  %265 = vmatprep.subr.mxu0 0.0
  %266 = vmatpush1.msra.mxu0 0.0
  %267 = vmatprep.subr.mxu0 0.0
  %268 = vmatpush1.msra.mxu0 0.0
  %269 = vmatprep.subr.mxu0 0.0
  %270 = vmatpush1.msra.mxu0 0.0
  %271 = vmatprep.subr.mxu0 0.0
  %272 = vmatpush1.msra.mxu0 0.0
  %273 = vmatprep.subr.mxu0 0.0
  %274 = vmatpush1.msra.mxu0 0.0
  %275 = vmatprep.subr.mxu0 0.0
  %276 = vmatpush1.msra.mxu0 0.0
  %277 = vmatprep.subr.mxu0 0.0
  %278 = vmatpush1.msra.mxu0 0.0
  %279 = vmatprep.subr.mxu0 0.0
  %280 = vmatpush1.msra.mxu0 0.0
  %281 = vmatprep.subr.mxu0 0.0
  %282 = vmatpush1.msra.mxu0 0.0
  %283 = vmatprep.subr.mxu0 0.0
  %284 = vmatpush1.msra.mxu0 0.0
  %285 = vmatprep.subr.mxu0 0.0
  %286 = vmatpush1.msra.mxu0 0.0
  %287 = vmatprep.subr.mxu0 0.0
  %288 = vmatpush1.msra.mxu0 0.0
  %289 = vmatprep.subr.mxu0 0.0
  %290 = vmatpush1.msra.mxu0 0.0
  %291 = vmatprep.mubr.f32.mxu0 0.0
  %292 = vmatmul.mubr.f32.gmra.mrb[0].mxu0 %v129
  %v293 = vpop.f32.mrb[0].mxu0
  %v294 = vadd.f32 0.0, %v293
  %v295 = vpop.f32.mrb[0].mxu0
  %v296 = vadd.f32 0.0, %v295
  %297 = vdwg.mxu0
  %298 = vmatprep.subr.mxu0 %v20
  %299 = vmatpush1.msra.mxu0 %v19
  %300 = vmatprep.subr.mxu0 %v28
  %301 = vmatpush1.msra.mxu0 %v27
  %302 = vmatprep.subr.mxu0 %v36
  %303 = vmatpush1.msra.mxu0 %v35
  %304 = vmatprep.subr.mxu0 %v44
  %305 = vmatpush1.msra.mxu0 %v43
  %306 = vmatprep.subr.mxu0 %v52
  %307 = vmatpush1.msra.mxu0 %v51
  %308 = vmatprep.subr.mxu0 %v60
  %309 = vmatpush1.msra.mxu0 %v59
  %310 = vmatprep.subr.mxu0 %v68
  %311 = vmatpush1.msra.mxu0 %v67
  %312 = vmatprep.subr.mxu0 %v76
  %313 = vmatpush1.msra.mxu0 %v75
  %314 = vmatprep.subr.mxu0 %v84
  %315 = vmatpush1.msra.mxu0 %v83
  %316 = vmatprep.subr.mxu0 %v92
  %317 = vmatpush1.msra.mxu0 %v91
  %318 = vmatprep.subr.mxu0 %v100
  %319 = vmatpush1.msra.mxu0 %v99
  %320 = vmatprep.subr.mxu0 %v108
  %321 = vmatpush1.msra.mxu0 %v107
  %322 = vmatprep.subr.mxu0 %v116
  %323 = vmatpush1.msra.mxu0 %v115
  %324 = vmatprep.subr.mxu0 %v148
  %325 = vmatpush1.msra.mxu0 %v145
  %326 = vmatprep.subr.mxu0 0.0
  %327 = vmatpush1.msra.mxu0 0.0
  %328 = vmatprep.subr.mxu0 0.0
  %329 = vmatpush1.msra.mxu0 0.0
  %330 = vmatprep.subr.mxu0 0.0
  %331 = vmatpush1.msra.mxu0 0.0
  %332 = vmatprep.subr.mxu0 0.0
  %333 = vmatpush1.msra.mxu0 0.0
  %334 = vmatprep.subr.mxu0 0.0
  %335 = vmatpush1.msra.mxu0 0.0
  %336 = vmatprep.subr.mxu0 0.0
  %337 = vmatpush1.msra.mxu0 0.0
  %338 = vmatprep.subr.mxu0 0.0
  %339 = vmatpush1.msra.mxu0 0.0
  %340 = vmatprep.subr.mxu0 0.0
  %341 = vmatpush1.msra.mxu0 0.0
  %342 = vmatprep.subr.mxu0 0.0
  %343 = vmatpush1.msra.mxu0 0.0
  %344 = vmatprep.subr.mxu0 0.0
  %345 = vmatpush1.msra.mxu0 0.0
  %346 = vmatprep.subr.mxu0 0.0
  %347 = vmatpush1.msra.mxu0 0.0
  %348 = vmatprep.subr.mxu0 0.0
  %349 = vmatpush1.msra.mxu0 0.0
  %350 = vmatprep.subr.mxu0 0.0
  %351 = vmatpush1.msra.mxu0 0.0
  %352 = vmatprep.subr.mxu0 0.0
  %353 = vmatpush1.msra.mxu0 0.0
  %354 = vmatprep.subr.mxu0 0.0
  %355 = vmatpush1.msra.mxu0 0.0
  %356 = vmatprep.subr.mxu0 0.0
  %357 = vmatpush1.msra.mxu0 0.0
  %358 = vmatprep.subr.mxu0 0.0
  %359 = vmatpush1.msra.mxu0 0.0
  %360 = vmatprep.subr.mxu0 0.0
  %361 = vmatpush1.msra.mxu0 0.0
  %362 = vmatprep.mubr.f32.mxu0 0.0
  %363 = vmatmul.mubr.f32.gmra.mrb[0].mxu0 %v129
  %v364 = vpop.f32.mrb[0].mxu0
  %v365 = vadd.f32 0.0, %v364
  %v366 = vpop.f32.mrb[0].mxu0
  %v367 = vadd.f32 0.0, %v366
  %368 = vdwg.mxu0
  %369 = vmatprep.subr.mxu0 %v22
  %370 = vmatpush1.msra.mxu0 %v21
  %371 = vmatprep.subr.mxu0 %v30
  %372 = vmatpush1.msra.mxu0 %v29
  %373 = vmatprep.subr.mxu0 %v38
  %374 = vmatpush1.msra.mxu0 %v37
  %375 = vmatprep.subr.mxu0 %v46
  %376 = vmatpush1.msra.mxu0 %v45
  %377 = vmatprep.subr.mxu0 %v54
  %378 = vmatpush1.msra.mxu0 %v53
  %379 = vmatprep.subr.mxu0 %v62
  %380 = vmatpush1.msra.mxu0 %v61
  %381 = vmatprep.subr.mxu0 %v70
  %382 = vmatpush1.msra.mxu0 %v69
  %383 = vmatprep.subr.mxu0 %v78
  %384 = vmatpush1.msra.mxu0 %v77
  %385 = vmatprep.subr.mxu0 %v86
  %386 = vmatpush1.msra.mxu0 %v85
  %387 = vmatprep.subr.mxu0 %v94
  %388 = vmatpush1.msra.mxu0 %v93
  %389 = vmatprep.subr.mxu0 %v102
  %390 = vmatpush1.msra.mxu0 %v101
  %391 = vmatprep.subr.mxu0 %v110
  %392 = vmatpush1.msra.mxu0 %v109
  %393 = vmatprep.subr.mxu0 %v118
  %394 = vmatpush1.msra.mxu0 %v117
  %395 = vmatprep.subr.mxu0 %v154
  %396 = vmatpush1.msra.mxu0 %v151
  %397 = vmatprep.subr.mxu0 0.0
  %398 = vmatpush1.msra.mxu0 0.0
  %399 = vmatprep.subr.mxu0 0.0
  %400 = vmatpush1.msra.mxu0 0.0
  %401 = vmatprep.subr.mxu0 0.0
  %402 = vmatpush1.msra.mxu0 0.0
  %403 = vmatprep.subr.mxu0 0.0
  %404 = vmatpush1.msra.mxu0 0.0
  %405 = vmatprep.subr.mxu0 0.0
  %406 = vmatpush1.msra.mxu0 0.0
  %407 = vmatprep.subr.mxu0 0.0
  %408 = vmatpush1.msra.mxu0 0.0
  %409 = vmatprep.subr.mxu0 0.0
  %410 = vmatpush1.msra.mxu0 0.0
  %411 = vmatprep.subr.mxu0 0.0
  %412 = vmatpush1.msra.mxu0 0.0
  %413 = vmatprep.subr.mxu0 0.0
  %414 = vmatpush1.msra.mxu0 0.0
  %415 = vmatprep.subr.mxu0 0.0
  %416 = vmatpush1.msra.mxu0 0.0
  %417 = vmatprep.subr.mxu0 0.0
  %418 = vmatpush1.msra.mxu0 0.0
  %419 = vmatprep.subr.mxu0 0.0
  %420 = vmatpush1.msra.mxu0 0.0
  %421 = vmatprep.subr.mxu0 0.0
  %422 = vmatpush1.msra.mxu0 0.0
  %423 = vmatprep.subr.mxu0 0.0
  %424 = vmatpush1.msra.mxu0 0.0
  %425 = vmatprep.subr.mxu0 0.0
  %426 = vmatpush1.msra.mxu0 0.0
  %427 = vmatprep.subr.mxu0 0.0
  %428 = vmatpush1.msra.mxu0 0.0
  %429 = vmatprep.subr.mxu0 0.0
  %430 = vmatpush1.msra.mxu0 0.0
  %431 = vmatprep.subr.mxu0 0.0
  %432 = vmatpush1.msra.mxu0 0.0
  %433 = vmatprep.mubr.f32.mxu0 0.0
  %434 = vmatmul.mubr.f32.gmra.mrb[0].mxu0 %v129
  %v435 = vpop.f32.mrb[0].mxu0
  %v436 = vadd.f32 0.0, %v435
  %v437 = vpop.f32.mrb[0].mxu0
  %v438 = vadd.f32 0.0, %v437
  %439 = vdwg.mxu0
  %440 = vst [vmem:[%s2] sm:$0xff] %v223
  %441 = vst [vmem:[%s2 + $0x8] sm:$0xff] %v225
  %442 = vst [vmem:[%s2 + $0x10] sm:$0xff] %v294
  %443 = vst [vmem:[%s2 + $0x18] sm:$0xff] %v296
  %444 = vst [vmem:[%s2 + $0x20] sm:$0xff] %v365
  %445 = vst [vmem:[%s2 + $0x28] sm:$0xff] %v367
  %446 = vst [vmem:[%s2 + $0x30] sm:$0xff] %v436
  %447 = vst [vmem:[%s2 + $0x38] sm:$0xff] %v438
  %v448 = vadd.f32 %v223, %v225
  %v449 = vadd.f32 %v448, %v294
  %v450 = vadd.f32 %v449, %v296
  %v451 = vadd.f32 %v450, %v365
  %v452 = vadd.f32 %v451, %v367
  %v453 = vadd.f32 %v452, %v436
  %v454 = vadd.f32 %v453, %v438
  %455 = vadd.xlane.f32.xlu0 %v454
  %v456 = vpop.xlane.xlu0 %455
  %vm457 = vcmask 7168
  %458 = vst.msk [vmem:[%s3] sm:$0xff] %vm457, %v456
  %v459 = vmul.f32 %v223, %v223
  %v460 = vmul.f32 %v225, %v225
  %v461 = vmul.f32 %v294, %v294
  %v462 = vmul.f32 %v296, %v296
  %v463 = vmul.f32 %v365, %v365
  %v464 = vmul.f32 %v367, %v367
  %v465 = vmul.f32 %v436, %v436
  %v466 = vmul.f32 %v438, %v438
  %v467 = vadd.f32 %v459, %v460
  %v468 = vadd.f32 %v467, %v461
  %v469 = vadd.f32 %v468, %v462
  %v470 = vadd.f32 %v469, %v463
  %v471 = vadd.f32 %v470, %v464
  %v472 = vadd.f32 %v471, %v465
  %v473 = vadd.f32 %v472, %v466
  %474 = vadd.xlane.f32.xlu0 %v473
  %v475 = vpop.xlane.xlu0 %474
  %476 = vst.msk [vmem:[%s4] sm:$0xff] %vm457, %v475
  // Predicated region
  $region10: #{conv_bn_relu_3d.2} parent=0 // pred_check
    _
  $region11: #{conv_bn_relu_3d.2} parent=0 // pred_check_branch
    %478 = sbr.rel (0) target = $region13
  $region12: #{conv_bn_relu_3d.2} parent=0 // pred_region
    _
  $region13: #{conv_bn_relu_3d.2} parent=0 // pred_fallthru
    _
  // Predicated region
  $region14: #{conv_bn_relu_3d.2} parent=0 // pred_check
    _
  $region15: #{conv_bn_relu_3d.2} parent=0 // pred_check_branch
    %480 = sbr.rel (0) target = $region17
  $region16: #{conv_bn_relu_3d.2} parent=0 // pred_region
    _
  $region17: #{conv_bn_relu_3d.2} parent=0 // pred_fallthru
    _
  // Predicated region
  $region18: #{conv_bn_relu_3d.2} parent=0 // pred_check
    _
  $region19: #{conv_bn_relu_3d.2} parent=0 // pred_check_branch
    %482 = sbr.rel (0) target = $region21
  $region20: #{conv_bn_relu_3d.2} parent=0 // pred_region
    _
  $region21: #{conv_bn_relu_3d.2} parent=0 // pred_fallthru
    _
  // Predicated region
  $region22: #{conv_bn_relu_3d.2} parent=0 // pred_check
    _
  $region23: #{conv_bn_relu_3d.2} parent=0 // pred_check_branch
    %484 = sbr.rel (0) target = $region25
  $region24: #{conv_bn_relu_3d.2} parent=0 // pred_region
    _
  $region25: #{conv_bn_relu_3d.2} parent=0 // pred_fallthru
    _
  // Predicated region
  $region26: #{conv_bn_relu_3d.2} parent=0 // pred_check
    _
  $region27: #{conv_bn_relu_3d.2} parent=0 // pred_check_branch
    %486 = sbr.rel (0) target = $region29
  $region28: #{conv_bn_relu_3d.2} parent=0 // pred_region
    _
  $region29: #{conv_bn_relu_3d.2} parent=0 // pred_fallthru
    _
  // Predicated region
  $region30: #{conv_bn_relu_3d.2} parent=0 // pred_check
    _
  $region31: #{conv_bn_relu_3d.2} parent=0 // pred_check_branch
    %488 = sbr.rel (0) target = $region33
  $region32: #{conv_bn_relu_3d.2} parent=0 // pred_region
    _
  $region33: #{conv_bn_relu_3d.2} parent=0 // pred_fallthru
    _

// kernel: conv_bn_relu_3d.3
$region0: #{conv_bn_relu_3d.3}
  #allocation0 [shape = 'u32[]', space=smem, size = 0x4, offset = 0x4, fixed_abs, tag = 'smem constant byte address 0x4 - core index']
  #allocation1 [shape = 'u32[144,128]{1,0:T(1,128)}', space=vmem, size = 0x12000, scoped, tag = 'internal scratch']
  %s0 = inlined_call_operand.vmem [shape: f32[8,1024], index: 0, kind: input, shape index: {}, may-alias: {0,3}]
  %s1 = inlined_call_operand.vmem [shape: f32[8,1], index: 1, kind: input, shape index: {}]
  %s2 = inlined_call_operand.vmem [shape: f32[8,1], index: 2, kind: input, shape index: {}]
  %s3 = inlined_call_operand.vmem [shape: f32[8,1024], index: 3, kind: output, shape index: {}, may-alias: {0,3}]
  %s4 = sld [smem:[#allocation0]]
  $region22: #{conv_bn_relu_3d.3} parent=0
    _
  %s6 = ssub.s32 1, %s4
  %s7 = scalar_select 0, %s6, %s4
  // Predicated region
  $region2: #{conv_bn_relu_3d.3} parent=0 // pred_check
    _
  $region3: #{conv_bn_relu_3d.3} parent=0 // pred_check_branch
    %9 = sbr.rel (0) target = $region5
  $region4: #{conv_bn_relu_3d.3} parent=0 // pred_region
    _
  $region5: #{conv_bn_relu_3d.3} parent=0 // pred_fallthru
    _
  // Predicated region
  $region6: #{conv_bn_relu_3d.3} parent=0 // pred_check
    _
  $region7: #{conv_bn_relu_3d.3} parent=0 // pred_check_branch
    %11 = sbr.rel (0) target = $region9
  $region8: #{conv_bn_relu_3d.3} parent=0 // pred_region
    _
  $region9: #{conv_bn_relu_3d.3} parent=0 // pred_fallthru
    _
  // Predicated region
  $region10: #{conv_bn_relu_3d.3} parent=0 // pred_check
    _
  $region11: #{conv_bn_relu_3d.3} parent=0 // pred_check_branch
    %13 = sbr.rel (0) target = $region13
  $region12: #{conv_bn_relu_3d.3} parent=0 // pred_region
    _
  $region13: #{conv_bn_relu_3d.3} parent=0 // pred_fallthru
    _
  %v14 = vld [vmem:[%s0] sm:$0xff]
  %v15 = vld [vmem:[%s0 + $0x8] sm:$0xff]
  %v16 = vld [vmem:[%s0 + $0x10] sm:$0xff]
  %v17 = vld [vmem:[%s0 + $0x18] sm:$0xff]
  %v18 = vld [vmem:[%s0 + $0x20] sm:$0xff]
  %v19 = vld [vmem:[%s0 + $0x28] sm:$0xff]
  %v20 = vld [vmem:[%s0 + $0x30] sm:$0xff]
  %v21 = vld [vmem:[%s0 + $0x38] sm:$0xff]
  %v22 = vld [vmem:[%s1] sm:$0xff]
  %24 = vset.pattern.permute.xlu0 0
  %25 = vperm.xlu0 %24, %v22
  %v26 = vpop.permute.xlu0 %25
  %v28 = vmul.f32 %v14, %v26
  %v29 = vmul.f32 %v15, %v26
  %v30 = vmul.f32 %v16, %v26
  %v31 = vmul.f32 %v17, %v26
  %v32 = vmul.f32 %v18, %v26
  %v33 = vmul.f32 %v19, %v26
  %v34 = vmul.f32 %v20, %v26
  %v35 = vmul.f32 %v21, %v26
  %v36 = vld [vmem:[%s2] sm:$0xff]
  %38 = vset.pattern.permute.xlu0 0
  %39 = vperm.xlu0 %38, %v36
  %v40 = vpop.permute.xlu0 %39
  %v42 = vadd.f32 %v28, %v40
  %v43 = vadd.f32 %v29, %v40
  %v44 = vadd.f32 %v30, %v40
  %v45 = vadd.f32 %v31, %v40
  %v46 = vadd.f32 %v32, %v40
  %v47 = vadd.f32 %v33, %v40
  %v48 = vadd.f32 %v34, %v40
  %v49 = vadd.f32 %v35, %v40
  %v50 = vmax.f32 %v42, 0.0
  %v51 = vmax.f32 %v43, 0.0
  %v52 = vmax.f32 %v44, 0.0
  %v53 = vmax.f32 %v45, 0.0
  %v54 = vmax.f32 %v46, 0.0
  %v55 = vmax.f32 %v47, 0.0
  %v56 = vmax.f32 %v48, 0.0
  %v57 = vmax.f32 %v49, 0.0
  %58 = vst [vmem:[%s3] sm:$0xff] %v50
  %59 = vst [vmem:[%s3 + $0x8] sm:$0xff] %v51
  %60 = vst [vmem:[%s3 + $0x10] sm:$0xff] %v52
  %61 = vst [vmem:[%s3 + $0x18] sm:$0xff] %v53
  %62 = vst [vmem:[%s3 + $0x20] sm:$0xff] %v54
  %63 = vst [vmem:[%s3 + $0x28] sm:$0xff] %v55
  %64 = vst [vmem:[%s3 + $0x30] sm:$0xff] %v56
  %65 = vst [vmem:[%s3 + $0x38] sm:$0xff] %v57
  // Predicated region
  $region14: #{conv_bn_relu_3d.3} parent=0 // pred_check
    _
  $region15: #{conv_bn_relu_3d.3} parent=0 // pred_check_branch
    %67 = sbr.rel (0) target = $region17
  $region16: #{conv_bn_relu_3d.3} parent=0 // pred_region
    _
  $region17: #{conv_bn_relu_3d.3} parent=0 // pred_fallthru
    _
  // Predicated region
  $region18: #{conv_bn_relu_3d.3} parent=0 // pred_check
    _
  $region19: #{conv_bn_relu_3d.3} parent=0 // pred_check_branch
    %69 = sbr.rel (0) target = $region21
  $region20: #{conv_bn_relu_3d.3} parent=0 // pred_region
    _
  $region21: #{conv_bn_relu_3d.3} parent=0 // pred_fallthru
    _

</llo_original>
